<compile_context>
chip_gen: v5e
topology: v5e:2x2
jax: 0.10.0
libtpu: 0.0.40
codegen_flags: <defaults>
</compile_context>

<pallas_src>
import functools

import jax
import jax.numpy as jnp
import numpy as np
from jax.experimental import pallas as pl
from jax.experimental.pallas import tpu as pltpu


# Column layout of the packed per-channel weight array (C, 24).
_MG = 0                                   # maxgate weights, kk = kh*2+kw (4 cols)
_MB = 4                                   # maxgate bias                  (1 col)
_PG0 = 5                                  # 0.5 * gate-0 depthwise weights (4 cols)
_PG1 = 9                                  # 0.5 * gate-1 depthwise weights (4 cols)
_PG2 = 13                                 # 0.5 * final-gate depthwise weights (4)
_GB0, _GB1, _GB2 = 17, 18, 19             # 0.5 * gate biases
_A0B, _B0B, _A1B, _B1B = 20, 21, 22, 23   # leaf biases 0.5*(pb1+/-pb2) per pair
_NCOL = 24


def cmaxga2_kernel(taps_ref, wpk_ref, msk_ref, pcs_ref, out_ref, *, Wo):
    """One (batch, channel-tile) block.

    taps_ref: (4, 1, c_tile, S)  4 stride-2 phase taps (io_dtype), S=Ho*Wo lanes
    wpk_ref : (c_tile, 24)       packed per-channel weights/biases (f32, VMEM)
    msk_ref : (3, S)             final-gate boundary masks {0,1} (f32, resident)
    pcs_ref : (16,)              channel-shared pconv weights (f32, SMEM scalars)
    out_ref : (1, c_tile, S)     f32 output
    """
    S = out_ref.shape[-1]
    f32 = jnp.float32
    # Upcast right after load (bf16 I/O mode keeps all arithmetic in f32).
    taps = [taps_ref[kk].astype(f32) for kk in range(4)]     # each (1, c_tile, S)

    def wcol(j):                                              # per-channel column
        return wpk_ref[:, j:j + 1]                            # (c_tile, 1) -> bcast over S

    def dwconv(col0, bias_col):
        # stride-2 2x2 depthwise conv == per-channel weighted sum of the 4 taps
        acc = taps[0] * wcol(col0)
        for kk in range(1, 4):
            acc = acc + taps[kk] * wcol(col0 + kk)
        return acc + wcol(bias_col)

    def pconv(row, bias_col):
        # channel-shared 2x2 conv weights: scalar splats straight from SMEM
        acc = taps[0] * pcs_ref[4 * row + 0]
        for kk in range(1, 4):
            acc = acc + taps[kk] * pcs_ref[4 * row + kk]
        return acc + wcol(bias_col)

    # ---- max pool * max gate ----
    max_out = jnp.maximum(jnp.maximum(taps[0], taps[1]),
                          jnp.maximum(taps[2], taps[3]))
    out = max_out * dwconv(_MG, _MB)

    # ---- gated pooling tree, level 1.  With the 0.5 folds done in packing:
    #      node = 0.5*(p1+p2) + tanh(0.5*(gconv+gb)) * 0.5*(p1-p2) = A + t*B ----
    t0 = jnp.tanh(dwconv(_PG0, _GB0))
    node0 = pconv(0, _A0B) + t0 * pconv(1, _B0B)
    t1 = jnp.tanh(dwconv(_PG1, _GB1))
    node1 = pconv(2, _A1B) + t1 * pconv(3, _B1B)

    # ---- final gate: stride-1 2x2 depthwise conv on node0 zero-padded at the
    #      bottom/right.  Shifts are lane rolls (XLU); boundary zeroing uses the
    #      precomputed masks; contributions are accumulated directly into the
    #      pre-activation (no materialised shifted copies). ----
    m01 = msk_ref[0:1, :]                                      # wo+1 < Wo
    m10 = msk_ref[1:2, :]                                      # ho+1 < Ho
    m11 = msk_ref[2:3, :]                                      # both
    z2 = (node0 * wcol(_PG2)
          + (pltpu.roll(node0, S - 1, axis=2) * m01) * wcol(_PG2 + 1)
          + (pltpu.roll(node0, S - Wo, axis=2) * m10) * wcol(_PG2 + 2)
          + (pltpu.roll(node0, S - Wo - 1, axis=2) * m11) * wcol(_PG2 + 3)
          + wcol(_GB2))
    t2 = jnp.tanh(z2)

    # out += node0*g2 + node1*(1-g2)  ==  out + 0.5*(node0+node1) + t2*0.5*(node0-node1)
    d = 0.5 * (node0 - node1)
    out_ref[...] = out + (node1 + d) + t2 * d


# ---------------------------------------------------------------------------
# tiling helpers (generation-aware)
# ---------------------------------------------------------------------------
def _vmem_limit_bytes():
    """Scoped-VMEM limit derived from the actual chip (v7x 64 MiB vs 128 MiB)."""
    phys = 64 * 1024 * 1024                       # conservative (v7x) fallback
    try:
        info = pltpu.get_tpu_info()
        phys = int(getattr(info, "vmem_capacity_bytes", phys)) or phys
    except Exception:
        pass
    return int(min(0.85 * phys, 112 * 2 ** 20))


def _pick_c_tile(C_pad, S, N, io_bytes, budget):
    """Largest channel tile whose real VMEM footprint fits the budget, with
    enough grid steps to keep both v7x TensorCores busy."""
    def est(t):
        taps_blk = 4 * t * S * io_bytes           # input block
        out_blk = t * S * 4                       # output block
        temps = 14 * t * S * 4                    # live f32 temporaries in-body
        return 2 * taps_blk + 2 * out_blk + temps + 2 * t * _NCOL * 4

    step = 16 if io_bytes == 2 else 8             # bf16 prefers sublane-packed tiles
    divisors = [t for t in range(step, C_pad + 1, step) if C_pad % t == 0]
    if not divisors:
        divisors = [t for t in range(8, C_pad + 1, 8) if C_pad % t == 0]
    fitting = [t for t in divisors if est(t) <= budget]
    c_tile = max(fitting) if fitting else min(divisors)

    def steps(t):
        return N * (C_pad // t)

    # soft preference: >= 8 grid steps as long as the taps block stays >= 1 MiB
    while steps(c_tile) < 8:
        smaller = [t for t in divisors
                   if t < c_tile and 4 * t * S * io_bytes >= (1 << 20)]
        if not smaller:
            break
        c_tile = max(smaller)
    # hard requirement: >= 2 steps whenever possible (megacore)
    while steps(c_tile) < 2:
        smaller = [t for t in divisors if t < c_tile]
        if not smaller:
            break
        c_tile = max(smaller)
    return c_tile


# ---------------------------------------------------------------------------
# weight packing / masks (tiny glue, all << activations)
# ---------------------------------------------------------------------------
def _pack_weights(params, C):
    mg = params['maxgate'].reshape(C, 4)                                # (C, kk)
    mb = params['mb'].reshape(C, 1)
    # 0.5 folded into all gate weights/biases (sigmoid -> tanh affine fold)
    pg = 0.5 * jnp.transpose(params['pgates'].reshape(C, 4, 3),
                             (0, 2, 1)).reshape(C, 12)                  # (C, g*4+kk)
    gbs = 0.5 * params['gbs']                                           # (C, 3)
    pbs = params['pbs']                                                 # (C, 4)
    pbias = 0.5 * jnp.stack([pbs[:, 0] + pbs[:, 1], pbs[:, 0] - pbs[:, 1],
                             pbs[:, 2] + pbs[:, 3], pbs[:, 2] - pbs[:, 3]],
                            axis=1)                                     # (C, 4)
    wpk = jnp.concatenate([mg, mb, pg, gbs, pbias], axis=1)             # (C, 24)

    pc = params['pconvs'].reshape(4, 4)                                 # (kk, leaf)
    pcs = 0.5 * jnp.stack([pc[:, 0] + pc[:, 1], pc[:, 0] - pc[:, 1],
                           pc[:, 2] + pc[:, 3], pc[:, 2] - pc[:, 3]],
                          axis=0)                                       # (4 rows, kk)
    return wpk.astype(jnp.float32), pcs.reshape(-1).astype(jnp.float32)  # (16,)


def _make_masks(Ho, Wo):
    S = Ho * Wo
    lane = jnp.arange(S, dtype=jnp.int32)
    w_ok = (lane % Wo) < (Wo - 1)
    h_ok = lane < (Ho - 1) * Wo
    return jnp.stack([w_ok, h_ok, w_ok & h_ok]).astype(jnp.float32)     # (3, S)


# ---------------------------------------------------------------------------
# forward
# ---------------------------------------------------------------------------
def cmaxga2_forward(x, params, *, c_tile=None, io_dtype=jnp.float32):
    """x: (N, C, H, W) float32 NCHW (like PyTorch). Returns (N, C, H//2, W//2).

    io_dtype=jnp.bfloat16 halves the activation HBM bytes (v5e option); all
    in-kernel arithmetic stays float32.  Call under jax.jit so the wrapper
    reshape/transpose/pad/cast fuse into a single pass over x.
    """
    N, C, H, W = x.shape
    assert H % 2 == 0 and W % 2 == 0, "cmaxga2 uses 2x2 / stride-2 windows"
    Ho, Wo = H // 2, W // 2
    S = Ho * Wo
    C_pad = ((C + 7) // 8) * 8

    io_dtype = jnp.dtype(io_dtype)
    io_bytes = io_dtype.itemsize
    vmem_limit = _vmem_limit_bytes()
    if c_tile is None:
        c_tile = _pick_c_tile(C_pad, S, N, io_bytes, budget=vmem_limit // 2)
    assert C_pad % c_tile == 0

    # Phase decomposition x[:, :, a::2, b::2] (a,b in {0,1}) as ONE fused
    # reshape+transpose(+pad+cast) pass; channel order preserved so the kernel
    # output is already NCHW.  (Kept per the roofline argument in the header.)
    taps = jnp.transpose(x.reshape(N, C, Ho, 2, Wo, 2), (3, 5, 0, 1, 2, 4))
    taps = taps.reshape(4, N, C, S).astype(io_dtype)
    if C_pad != C:
        taps = jnp.pad(taps, ((0, 0), (0, 0), (0, C_pad - C), (0, 0)))

    wpk, pcs = _pack_weights(params, C)
    if C_pad != C:
        wpk = jnp.pad(wpk, ((0, C_pad - C), (0, 0)))
    masks = _make_masks(Ho, Wo)

    grid = (N, C_pad // c_tile)
    out_flat = pl.pallas_call(
        functools.partial(cmaxga2_kernel, Wo=Wo),
        out_shape=jax.ShapeDtypeStruct((N, C_pad, S), jnp.float32),
        grid_spec=pltpu.PrefetchScalarGridSpec(
            num_scalar_prefetch=0,
            grid=grid,
            in_specs=[
                # 4 phase taps for this (n, channel-tile); spatial never tiled
                pl.BlockSpec((4, 1, c_tile, S), lambda n, cj: (0, n, cj, 0)),
                # packed per-channel weights: follows the channel tile only
                pl.BlockSpec((c_tile, _NCOL), lambda n, cj: (cj, 0)),
                # final-gate boundary masks: grid-invariant, stays resident
                pl.BlockSpec((3, S), lambda n, cj: (0, 0)),
                # channel-shared pconv weights: whole (16,) array in SMEM
                pl.BlockSpec(memory_space=pltpu.MemorySpace.SMEM),
            ],
            out_specs=pl.BlockSpec((1, c_tile, S), lambda n, cj: (n, cj, 0)),
        ),
        compiler_params=pltpu.CompilerParams(
            dimension_semantics=("parallel", "parallel"),
            vmem_limit_bytes=vmem_limit),
    )(taps, wpk, masks, pcs)

    out = out_flat[:, :C] if C_pad != C else out_flat
    return out.reshape(N, C, Ho, Wo)


# ---------------- pure-JAX reference (mirrors the PyTorch forward) ----------------
def cmaxga2_reference(x, params):
    C = x.shape[1]

    def dw(x_in, w, b, stride):
        y = jax.lax.conv_general_dilated(
            x_in, w, (stride, stride), 'VALID',
            dimension_numbers=('NCHW', 'OIHW', 'NCHW'),
            feature_group_count=C)
        return y + b[None, :, None, None]

    max_out = jax.lax.reduce_window(x, -jnp.inf, jax.lax.max,
                                    (1, 1, 2, 2), (1, 1, 2, 2), 'VALID')
    max_gate = dw(x, params['maxgate'], params['mb'], 2)
    out = max_out * max_gate

    leaves = []
    for c in range(2):
        pconv1 = jnp.tile(params['pconvs'][..., 2 * c], (C, 1, 1, 1))
        pconv2 = jnp.tile(params['pconvs'][..., 2 * c + 1], (C, 1, 1, 1))
        pgate = params['pgates'][..., c]
        gate = jax.nn.sigmoid(dw(x, pgate, params['gbs'][:, c], 2))
        p1 = dw(x, pconv1, params['pbs'][:, 2 * c], 2)
        p2 = dw(x, pconv2, params['pbs'][:, 2 * c + 1], 2)
        leaves.append(gate * p1)
        leaves.append((1.0 - gate) * p2)

    nodes = [leaves[0] + leaves[1], leaves[2] + leaves[3]]

    padded = jnp.pad(nodes[0], ((0, 0), (0, 0), (0, 1), (0, 1)))
    gate = jax.nn.sigmoid(dw(padded, params['pgates'][..., 2], params['gbs'][:, 2], 1))
    out = out + nodes[0] * gate + nodes[1] * (1.0 - gate)
    return out


def init_params(key, C, kernel_size=2, levels=2):
    leaves = levels ** 2
    gates = (leaves + levels) // 2
    ks = jax.random.split(key, 6)
    scale = 0.2
    return {
        'maxgate': scale * jax.random.normal(ks[0], (C, 1, kernel_size, kernel_size), jnp.float32),
        'pconvs':  scale * jax.random.normal(ks[1], (1, 1, kernel_size, kernel_size, leaves), jnp.float32),
        'pgates':  scale * jax.random.normal(ks[2], (C, 1, kernel_size, kernel_size, gates), jnp.float32),
        'mb':      scale * jax.random.normal(ks[3], (C,), jnp.float32),
        'pbs':     scale * jax.random.normal(ks[4], (C, leaves), jnp.float32),
        'gbs':     scale * jax.random.normal(ks[5], (C, gates), jnp.float32),
    }


if __name__ == "__main__":
    key = jax.random.PRNGKey(0)
    k_x, k_p = jax.random.split(key)

    N, C, H, W = 2, 4, 16, 16          # in_planes == out_planes == 4 (depthwise)
    x = jax.random.normal(k_x, (N, C, H, W), jnp.float32)
    params = init_params(k_p, C)

    ref = jax.block_until_ready(cmaxga2_reference(x, params))

    # f32 I/O path (exact-ish): tight tolerance
    fwd_f32 = jax.jit(functools.partial(cmaxga2_forward, io_dtype=jnp.float32))
    out = jax.block_until_ready(fwd_f32(x, params))
    assert out.shape == (N, C, H // 2, W // 2), out.shape
    np.testing.assert_allclose(np.asarray(out), np.asarray(ref), rtol=1e-5, atol=1e-5)

    # bf16 activation-I/O path (bandwidth option for v5e): looser tolerance
    fwd_bf16 = jax.jit(functools.partial(cmaxga2_forward, io_dtype=jnp.bfloat16))
    out_bf16 = jax.block_until_ready(fwd_bf16(x, params))
    np.testing.assert_allclose(np.asarray(out_bf16), np.asarray(ref), rtol=5e-2, atol=5e-2)

    print("KERNEL_OK")
</pallas_src>

<mosaic_0001>
module attributes {stable_mosaic.version = 11 : i64} {
  func.func @cmaxga2_kernel(%arg0: i32, %arg1: i32, %arg2: memref<4x1x8x64xf32, #tpu.memory_space<vmem>>, %arg3: memref<8x24xf32, #tpu.memory_space<vmem>>, %arg4: memref<3x64xf32, #tpu.memory_space<vmem>>, %arg5: memref<16xf32, #tpu.memory_space<smem>>, %arg6: memref<1x8x64xf32, #tpu.memory_space<vmem>>) attributes {dimension_semantics = [#tpu.dimension_semantics<parallel>, #tpu.dimension_semantics<parallel>], iteration_bounds = array<i64: 2, 1>, scalar_prefetch = 0 : i64, scratch_operands = 0 : i64, tpu.core_type = #tpu.core_type<tc>, window_params = [{transform_indices = @transform_0, window_bounds = array<i64: 4, 1, 8, 64>}, {transform_indices = @transform_1, window_bounds = array<i64: 8, 24>}, {pipeline_mode = #tpu.pipeline_mode<synchronous>, transform_indices = @transform_2, window_bounds = array<i64: 3, 64>}, {transform_indices = @transform_3, window_bounds = array<i64: 16>}, {transform_indices = @transform_4, window_bounds = array<i64: 1, 8, 64>}]} {
    %c0 = arith.constant 0 : index
    %c0_0 = arith.constant 0 : index
    %c0_1 = arith.constant 0 : index
    %c0_2 = arith.constant 0 : index
    %0 = vector.load %arg2[%c0, %c0_0, %c0_1, %c0_2] : memref<4x1x8x64xf32, #tpu.memory_space<vmem>>, vector<1x1x8x64xf32>
    %1 = vector.shape_cast %0 : vector<1x1x8x64xf32> to vector<1x8x64xf32>
    %c1 = arith.constant 1 : index
    %c0_3 = arith.constant 0 : index
    %c0_4 = arith.constant 0 : index
    %c0_5 = arith.constant 0 : index
    %2 = vector.load %arg2[%c1, %c0_3, %c0_4, %c0_5] : memref<4x1x8x64xf32, #tpu.memory_space<vmem>>, vector<1x1x8x64xf32>
    %3 = vector.shape_cast %2 : vector<1x1x8x64xf32> to vector<1x8x64xf32>
    %c2 = arith.constant 2 : index
    %c0_6 = arith.constant 0 : index
    %c0_7 = arith.constant 0 : index
    %c0_8 = arith.constant 0 : index
    %4 = vector.load %arg2[%c2, %c0_6, %c0_7, %c0_8] : memref<4x1x8x64xf32, #tpu.memory_space<vmem>>, vector<1x1x8x64xf32>
    %5 = vector.shape_cast %4 : vector<1x1x8x64xf32> to vector<1x8x64xf32>
    %c3 = arith.constant 3 : index
    %c0_9 = arith.constant 0 : index
    %c0_10 = arith.constant 0 : index
    %c0_11 = arith.constant 0 : index
    %6 = vector.load %arg2[%c3, %c0_9, %c0_10, %c0_11] : memref<4x1x8x64xf32, #tpu.memory_space<vmem>>, vector<1x1x8x64xf32>
    %7 = vector.shape_cast %6 : vector<1x1x8x64xf32> to vector<1x8x64xf32>
    %8 = arith.maximumf %1, %3 : vector<1x8x64xf32>
    %9 = arith.maximumf %5, %7 : vector<1x8x64xf32>
    %10 = arith.maximumf %8, %9 : vector<1x8x64xf32>
    %c0_12 = arith.constant 0 : index
    %c0_13 = arith.constant 0 : index
    %11 = vector.load %arg3[%c0_12, %c0_13] : memref<8x24xf32, #tpu.memory_space<vmem>>, vector<8x1xf32>
    %12 = vector.shape_cast %11 : vector<8x1xf32> to vector<1x8x1xf32>
    %13 = vector.broadcast %12 : vector<1x8x1xf32> to vector<1x8x64xf32>
    %14 = arith.mulf %1, %13 : vector<1x8x64xf32>
    %c0_14 = arith.constant 0 : index
    %c1_15 = arith.constant 1 : index
    %15 = vector.load %arg3[%c0_14, %c1_15] : memref<8x24xf32, #tpu.memory_space<vmem>>, vector<8x1xf32>
    %16 = vector.shape_cast %15 : vector<8x1xf32> to vector<1x8x1xf32>
    %17 = vector.broadcast %16 : vector<1x8x1xf32> to vector<1x8x64xf32>
    %18 = arith.mulf %3, %17 : vector<1x8x64xf32>
    %19 = arith.addf %14, %18 : vector<1x8x64xf32>
    %c0_16 = arith.constant 0 : index
    %c2_17 = arith.constant 2 : index
    %20 = vector.load %arg3[%c0_16, %c2_17] : memref<8x24xf32, #tpu.memory_space<vmem>>, vector<8x1xf32>
    %21 = vector.shape_cast %20 : vector<8x1xf32> to vector<1x8x1xf32>
    %22 = vector.broadcast %21 : vector<1x8x1xf32> to vector<1x8x64xf32>
    %23 = arith.mulf %5, %22 : vector<1x8x64xf32>
    %24 = arith.addf %19, %23 : vector<1x8x64xf32>
    %c0_18 = arith.constant 0 : index
    %c3_19 = arith.constant 3 : index
    %25 = vector.load %arg3[%c0_18, %c3_19] : memref<8x24xf32, #tpu.memory_space<vmem>>, vector<8x1xf32>
    %26 = vector.shape_cast %25 : vector<8x1xf32> to vector<1x8x1xf32>
    %27 = vector.broadcast %26 : vector<1x8x1xf32> to vector<1x8x64xf32>
    %28 = arith.mulf %7, %27 : vector<1x8x64xf32>
    %29 = arith.addf %24, %28 : vector<1x8x64xf32>
    %c0_20 = arith.constant 0 : index
    %c4 = arith.constant 4 : index
    %30 = vector.load %arg3[%c0_20, %c4] : memref<8x24xf32, #tpu.memory_space<vmem>>, vector<8x1xf32>
    %31 = vector.shape_cast %30 : vector<8x1xf32> to vector<1x8x1xf32>
    %32 = vector.broadcast %31 : vector<1x8x1xf32> to vector<1x8x64xf32>
    %33 = arith.addf %29, %32 : vector<1x8x64xf32>
    %34 = arith.mulf %10, %33 : vector<1x8x64xf32>
    %c0_21 = arith.constant 0 : index
    %c5 = arith.constant 5 : index
    %35 = vector.load %arg3[%c0_21, %c5] : memref<8x24xf32, #tpu.memory_space<vmem>>, vector<8x1xf32>
    %36 = vector.shape_cast %35 : vector<8x1xf32> to vector<1x8x1xf32>
    %37 = vector.broadcast %36 : vector<1x8x1xf32> to vector<1x8x64xf32>
    %38 = arith.mulf %1, %37 : vector<1x8x64xf32>
    %c0_22 = arith.constant 0 : index
    %c6 = arith.constant 6 : index
    %39 = vector.load %arg3[%c0_22, %c6] : memref<8x24xf32, #tpu.memory_space<vmem>>, vector<8x1xf32>
    %40 = vector.shape_cast %39 : vector<8x1xf32> to vector<1x8x1xf32>
    %41 = vector.broadcast %40 : vector<1x8x1xf32> to vector<1x8x64xf32>
    %42 = arith.mulf %3, %41 : vector<1x8x64xf32>
    %43 = arith.addf %38, %42 : vector<1x8x64xf32>
    %c0_23 = arith.constant 0 : index
    %c7 = arith.constant 7 : index
    %44 = vector.load %arg3[%c0_23, %c7] : memref<8x24xf32, #tpu.memory_space<vmem>>, vector<8x1xf32>
    %45 = vector.shape_cast %44 : vector<8x1xf32> to vector<1x8x1xf32>
    %46 = vector.broadcast %45 : vector<1x8x1xf32> to vector<1x8x64xf32>
    %47 = arith.mulf %5, %46 : vector<1x8x64xf32>
    %48 = arith.addf %43, %47 : vector<1x8x64xf32>
    %c0_24 = arith.constant 0 : index
    %c8 = arith.constant 8 : index
    %49 = vector.load %arg3[%c0_24, %c8] : memref<8x24xf32, #tpu.memory_space<vmem>>, vector<8x1xf32>
    %50 = vector.shape_cast %49 : vector<8x1xf32> to vector<1x8x1xf32>
    %51 = vector.broadcast %50 : vector<1x8x1xf32> to vector<1x8x64xf32>
    %52 = arith.mulf %7, %51 : vector<1x8x64xf32>
    %53 = arith.addf %48, %52 : vector<1x8x64xf32>
    %c0_25 = arith.constant 0 : index
    %c17 = arith.constant 17 : index
    %54 = vector.load %arg3[%c0_25, %c17] : memref<8x24xf32, #tpu.memory_space<vmem>>, vector<8x1xf32>
    %55 = vector.shape_cast %54 : vector<8x1xf32> to vector<1x8x1xf32>
    %56 = vector.broadcast %55 : vector<1x8x1xf32> to vector<1x8x64xf32>
    %57 = arith.addf %53, %56 : vector<1x8x64xf32>
    %58 = math.tanh %57 : vector<1x8x64xf32>
    %c0_26 = arith.constant 0 : index
    %59 = memref.load %arg5[%c0_26] : memref<16xf32, #tpu.memory_space<smem>>
    %60 = vector.broadcast %59 : f32 to vector<1x8x64xf32>
    %61 = arith.mulf %1, %60 : vector<1x8x64xf32>
    %c1_27 = arith.constant 1 : index
    %62 = memref.load %arg5[%c1_27] : memref<16xf32, #tpu.memory_space<smem>>
    %63 = vector.broadcast %62 : f32 to vector<1x8x64xf32>
    %64 = arith.mulf %3, %63 : vector<1x8x64xf32>
    %65 = arith.addf %61, %64 : vector<1x8x64xf32>
    %c2_28 = arith.constant 2 : index
    %66 = memref.load %arg5[%c2_28] : memref<16xf32, #tpu.memory_space<smem>>
    %67 = vector.broadcast %66 : f32 to vector<1x8x64xf32>
    %68 = arith.mulf %5, %67 : vector<1x8x64xf32>
    %69 = arith.addf %65, %68 : vector<1x8x64xf32>
    %c3_29 = arith.constant 3 : index
    %70 = memref.load %arg5[%c3_29] : memref<16xf32, #tpu.memory_space<smem>>
    %71 = vector.broadcast %70 : f32 to vector<1x8x64xf32>
    %72 = arith.mulf %7, %71 : vector<1x8x64xf32>
    %73 = arith.addf %69, %72 : vector<1x8x64xf32>
    %c0_30 = arith.constant 0 : index
    %c20 = arith.constant 20 : index
    %74 = vector.load %arg3[%c0_30, %c20] : memref<8x24xf32, #tpu.memory_space<vmem>>, vector<8x1xf32>
    %75 = vector.shape_cast %74 : vector<8x1xf32> to vector<1x8x1xf32>
    %76 = vector.broadcast %75 : vector<1x8x1xf32> to vector<1x8x64xf32>
    %77 = arith.addf %73, %76 : vector<1x8x64xf32>
    %c4_31 = arith.constant 4 : index
    %78 = memref.load %arg5[%c4_31] : memref<16xf32, #tpu.memory_space<smem>>
    %79 = vector.broadcast %78 : f32 to vector<1x8x64xf32>
    %80 = arith.mulf %1, %79 : vector<1x8x64xf32>
    %c5_32 = arith.constant 5 : index
    %81 = memref.load %arg5[%c5_32] : memref<16xf32, #tpu.memory_space<smem>>
    %82 = vector.broadcast %81 : f32 to vector<1x8x64xf32>
    %83 = arith.mulf %3, %82 : vector<1x8x64xf32>
    %84 = arith.addf %80, %83 : vector<1x8x64xf32>
    %c6_33 = arith.constant 6 : index
    %85 = memref.load %arg5[%c6_33] : memref<16xf32, #tpu.memory_space<smem>>
    %86 = vector.broadcast %85 : f32 to vector<1x8x64xf32>
    %87 = arith.mulf %5, %86 : vector<1x8x64xf32>
    %88 = arith.addf %84, %87 : vector<1x8x64xf32>
    %c7_34 = arith.constant 7 : index
    %89 = memref.load %arg5[%c7_34] : memref<16xf32, #tpu.memory_space<smem>>
    %90 = vector.broadcast %89 : f32 to vector<1x8x64xf32>
    %91 = arith.mulf %7, %90 : vector<1x8x64xf32>
    %92 = arith.addf %88, %91 : vector<1x8x64xf32>
    %c0_35 = arith.constant 0 : index
    %c21 = arith.constant 21 : index
    %93 = vector.load %arg3[%c0_35, %c21] : memref<8x24xf32, #tpu.memory_space<vmem>>, vector<8x1xf32>
    %94 = vector.shape_cast %93 : vector<8x1xf32> to vector<1x8x1xf32>
    %95 = vector.broadcast %94 : vector<1x8x1xf32> to vector<1x8x64xf32>
    %96 = arith.addf %92, %95 : vector<1x8x64xf32>
    %97 = arith.mulf %58, %96 : vector<1x8x64xf32>
    %98 = arith.addf %77, %97 : vector<1x8x64xf32>
    %c0_36 = arith.constant 0 : index
    %c9 = arith.constant 9 : index
    %99 = vector.load %arg3[%c0_36, %c9] : memref<8x24xf32, #tpu.memory_space<vmem>>, vector<8x1xf32>
    %100 = vector.shape_cast %99 : vector<8x1xf32> to vector<1x8x1xf32>
    %101 = vector.broadcast %100 : vector<1x8x1xf32> to vector<1x8x64xf32>
    %102 = arith.mulf %1, %101 : vector<1x8x64xf32>
    %c0_37 = arith.constant 0 : index
    %c10 = arith.constant 10 : index
    %103 = vector.load %arg3[%c0_37, %c10] : memref<8x24xf32, #tpu.memory_space<vmem>>, vector<8x1xf32>
    %104 = vector.shape_cast %103 : vector<8x1xf32> to vector<1x8x1xf32>
    %105 = vector.broadcast %104 : vector<1x8x1xf32> to vector<1x8x64xf32>
    %106 = arith.mulf %3, %105 : vector<1x8x64xf32>
    %107 = arith.addf %102, %106 : vector<1x8x64xf32>
    %c0_38 = arith.constant 0 : index
    %c11 = arith.constant 11 : index
    %108 = vector.load %arg3[%c0_38, %c11] : memref<8x24xf32, #tpu.memory_space<vmem>>, vector<8x1xf32>
    %109 = vector.shape_cast %108 : vector<8x1xf32> to vector<1x8x1xf32>
    %110 = vector.broadcast %109 : vector<1x8x1xf32> to vector<1x8x64xf32>
    %111 = arith.mulf %5, %110 : vector<1x8x64xf32>
    %112 = arith.addf %107, %111 : vector<1x8x64xf32>
    %c0_39 = arith.constant 0 : index
    %c12 = arith.constant 12 : index
    %113 = vector.load %arg3[%c0_39, %c12] : memref<8x24xf32, #tpu.memory_space<vmem>>, vector<8x1xf32>
    %114 = vector.shape_cast %113 : vector<8x1xf32> to vector<1x8x1xf32>
    %115 = vector.broadcast %114 : vector<1x8x1xf32> to vector<1x8x64xf32>
    %116 = arith.mulf %7, %115 : vector<1x8x64xf32>
    %117 = arith.addf %112, %116 : vector<1x8x64xf32>
    %c0_40 = arith.constant 0 : index
    %c18 = arith.constant 18 : index
    %118 = vector.load %arg3[%c0_40, %c18] : memref<8x24xf32, #tpu.memory_space<vmem>>, vector<8x1xf32>
    %119 = vector.shape_cast %118 : vector<8x1xf32> to vector<1x8x1xf32>
    %120 = vector.broadcast %119 : vector<1x8x1xf32> to vector<1x8x64xf32>
    %121 = arith.addf %117, %120 : vector<1x8x64xf32>
    %122 = math.tanh %121 : vector<1x8x64xf32>
    %c8_41 = arith.constant 8 : index
    %123 = memref.load %arg5[%c8_41] : memref<16xf32, #tpu.memory_space<smem>>
    %124 = vector.broadcast %123 : f32 to vector<1x8x64xf32>
    %125 = arith.mulf %1, %124 : vector<1x8x64xf32>
    %c9_42 = arith.constant 9 : index
    %126 = memref.load %arg5[%c9_42] : memref<16xf32, #tpu.memory_space<smem>>
    %127 = vector.broadcast %126 : f32 to vector<1x8x64xf32>
    %128 = arith.mulf %3, %127 : vector<1x8x64xf32>
    %129 = arith.addf %125, %128 : vector<1x8x64xf32>
    %c10_43 = arith.constant 10 : index
    %130 = memref.load %arg5[%c10_43] : memref<16xf32, #tpu.memory_space<smem>>
    %131 = vector.broadcast %130 : f32 to vector<1x8x64xf32>
    %132 = arith.mulf %5, %131 : vector<1x8x64xf32>
    %133 = arith.addf %129, %132 : vector<1x8x64xf32>
    %c11_44 = arith.constant 11 : index
    %134 = memref.load %arg5[%c11_44] : memref<16xf32, #tpu.memory_space<smem>>
    %135 = vector.broadcast %134 : f32 to vector<1x8x64xf32>
    %136 = arith.mulf %7, %135 : vector<1x8x64xf32>
    %137 = arith.addf %133, %136 : vector<1x8x64xf32>
    %c0_45 = arith.constant 0 : index
    %c22 = arith.constant 22 : index
    %138 = vector.load %arg3[%c0_45, %c22] : memref<8x24xf32, #tpu.memory_space<vmem>>, vector<8x1xf32>
    %139 = vector.shape_cast %138 : vector<8x1xf32> to vector<1x8x1xf32>
    %140 = vector.broadcast %139 : vector<1x8x1xf32> to vector<1x8x64xf32>
    %141 = arith.addf %137, %140 : vector<1x8x64xf32>
    %c12_46 = arith.constant 12 : index
    %142 = memref.load %arg5[%c12_46] : memref<16xf32, #tpu.memory_space<smem>>
    %143 = vector.broadcast %142 : f32 to vector<1x8x64xf32>
    %144 = arith.mulf %1, %143 : vector<1x8x64xf32>
    %c13 = arith.constant 13 : index
    %145 = memref.load %arg5[%c13] : memref<16xf32, #tpu.memory_space<smem>>
    %146 = vector.broadcast %145 : f32 to vector<1x8x64xf32>
    %147 = arith.mulf %3, %146 : vector<1x8x64xf32>
    %148 = arith.addf %144, %147 : vector<1x8x64xf32>
    %c14 = arith.constant 14 : index
    %149 = memref.load %arg5[%c14] : memref<16xf32, #tpu.memory_space<smem>>
    %150 = vector.broadcast %149 : f32 to vector<1x8x64xf32>
    %151 = arith.mulf %5, %150 : vector<1x8x64xf32>
    %152 = arith.addf %148, %151 : vector<1x8x64xf32>
    %c15 = arith.constant 15 : index
    %153 = memref.load %arg5[%c15] : memref<16xf32, #tpu.memory_space<smem>>
    %154 = vector.broadcast %153 : f32 to vector<1x8x64xf32>
    %155 = arith.mulf %7, %154 : vector<1x8x64xf32>
    %156 = arith.addf %152, %155 : vector<1x8x64xf32>
    %c0_47 = arith.constant 0 : index
    %c23 = arith.constant 23 : index
    %157 = vector.load %arg3[%c0_47, %c23] : memref<8x24xf32, #tpu.memory_space<vmem>>, vector<8x1xf32>
    %158 = vector.shape_cast %157 : vector<8x1xf32> to vector<1x8x1xf32>
    %159 = vector.broadcast %158 : vector<1x8x1xf32> to vector<1x8x64xf32>
    %160 = arith.addf %156, %159 : vector<1x8x64xf32>
    %161 = arith.mulf %122, %160 : vector<1x8x64xf32>
    %162 = arith.addf %141, %161 : vector<1x8x64xf32>
    %c0_48 = arith.constant 0 : index
    %c0_49 = arith.constant 0 : index
    %163 = vector.load %arg4[%c0_48, %c0_49] : memref<3x64xf32, #tpu.memory_space<vmem>>, vector<1x64xf32>
    %c1_50 = arith.constant 1 : index
    %c0_51 = arith.constant 0 : index
    %164 = vector.load %arg4[%c1_50, %c0_51] : memref<3x64xf32, #tpu.memory_space<vmem>>, vector<1x64xf32>
    %c2_52 = arith.constant 2 : index
    %c0_53 = arith.constant 0 : index
    %165 = vector.load %arg4[%c2_52, %c0_53] : memref<3x64xf32, #tpu.memory_space<vmem>>, vector<1x64xf32>
    %c0_54 = arith.constant 0 : index
    %c13_55 = arith.constant 13 : index
    %166 = vector.load %arg3[%c0_54, %c13_55] : memref<8x24xf32, #tpu.memory_space<vmem>>, vector<8x1xf32>
    %167 = vector.shape_cast %166 : vector<8x1xf32> to vector<1x8x1xf32>
    %168 = vector.broadcast %167 : vector<1x8x1xf32> to vector<1x8x64xf32>
    %169 = arith.mulf %98, %168 : vector<1x8x64xf32>
    %c63_i32 = arith.constant 63 : i32
    %170 = tpu.dynamic_rotate %98 by %c63_i32 dim 2 : vector<1x8x64xf32>, i32 -> vector<1x8x64xf32>
    %171 = vector.shape_cast %163 : vector<1x64xf32> to vector<1x1x64xf32>
    %172 = vector.broadcast %171 : vector<1x1x64xf32> to vector<1x8x64xf32>
    %173 = arith.mulf %170, %172 : vector<1x8x64xf32>
    %c0_56 = arith.constant 0 : index
    %c14_57 = arith.constant 14 : index
    %174 = vector.load %arg3[%c0_56, %c14_57] : memref<8x24xf32, #tpu.memory_space<vmem>>, vector<8x1xf32>
    %175 = vector.shape_cast %174 : vector<8x1xf32> to vector<1x8x1xf32>
    %176 = vector.broadcast %175 : vector<1x8x1xf32> to vector<1x8x64xf32>
    %177 = arith.mulf %173, %176 : vector<1x8x64xf32>
    %178 = arith.addf %169, %177 : vector<1x8x64xf32>
    %c56_i32 = arith.constant 56 : i32
    %179 = tpu.dynamic_rotate %98 by %c56_i32 dim 2 : vector<1x8x64xf32>, i32 -> vector<1x8x64xf32>
    %180 = vector.shape_cast %164 : vector<1x64xf32> to vector<1x1x64xf32>
    %181 = vector.broadcast %180 : vector<1x1x64xf32> to vector<1x8x64xf32>
    %182 = arith.mulf %179, %181 : vector<1x8x64xf32>
    %c0_58 = arith.constant 0 : index
    %c15_59 = arith.constant 15 : index
    %183 = vector.load %arg3[%c0_58, %c15_59] : memref<8x24xf32, #tpu.memory_space<vmem>>, vector<8x1xf32>
    %184 = vector.shape_cast %183 : vector<8x1xf32> to vector<1x8x1xf32>
    %185 = vector.broadcast %184 : vector<1x8x1xf32> to vector<1x8x64xf32>
    %186 = arith.mulf %182, %185 : vector<1x8x64xf32>
    %187 = arith.addf %178, %186 : vector<1x8x64xf32>
    %c55_i32 = arith.constant 55 : i32
    %188 = tpu.dynamic_rotate %98 by %c55_i32 dim 2 : vector<1x8x64xf32>, i32 -> vector<1x8x64xf32>
    %189 = vector.shape_cast %165 : vector<1x64xf32> to vector<1x1x64xf32>
    %190 = vector.broadcast %189 : vector<1x1x64xf32> to vector<1x8x64xf32>
    %191 = arith.mulf %188, %190 : vector<1x8x64xf32>
    %c0_60 = arith.constant 0 : index
    %c16 = arith.constant 16 : index
    %192 = vector.load %arg3[%c0_60, %c16] : memref<8x24xf32, #tpu.memory_space<vmem>>, vector<8x1xf32>
    %193 = vector.shape_cast %192 : vector<8x1xf32> to vector<1x8x1xf32>
    %194 = vector.broadcast %193 : vector<1x8x1xf32> to vector<1x8x64xf32>
    %195 = arith.mulf %191, %194 : vector<1x8x64xf32>
    %196 = arith.addf %187, %195 : vector<1x8x64xf32>
    %c0_61 = arith.constant 0 : index
    %c19 = arith.constant 19 : index
    %197 = vector.load %arg3[%c0_61, %c19] : memref<8x24xf32, #tpu.memory_space<vmem>>, vector<8x1xf32>
    %198 = vector.shape_cast %197 : vector<8x1xf32> to vector<1x8x1xf32>
    %199 = vector.broadcast %198 : vector<1x8x1xf32> to vector<1x8x64xf32>
    %200 = arith.addf %196, %199 : vector<1x8x64xf32>
    %201 = math.tanh %200 : vector<1x8x64xf32>
    %202 = arith.subf %98, %162 : vector<1x8x64xf32>
    %cst = arith.constant 5.000000e-01 : f32
    %203 = vector.broadcast %cst : f32 to vector<1x8x64xf32>
    %204 = arith.mulf %203, %202 : vector<1x8x64xf32>
    %205 = arith.addf %162, %204 : vector<1x8x64xf32>
    %206 = arith.addf %34, %205 : vector<1x8x64xf32>
    %207 = arith.mulf %201, %204 : vector<1x8x64xf32>
    %208 = arith.addf %206, %207 : vector<1x8x64xf32>
    %c0_62 = arith.constant 0 : index
    %c0_63 = arith.constant 0 : index
    %c0_64 = arith.constant 0 : index
    %209 = vector.load %arg6[%c0_62, %c0_63, %c0_64] : memref<1x8x64xf32, #tpu.memory_space<vmem>>, vector<1x8x64xf32>
    tpu.vector_store %arg6[%c0_62, %c0_63, %c0_64], %208 {strides = array<i32>} : memref<1x8x64xf32, #tpu.memory_space<vmem>>, vector<1x8x64xf32>,
    return
  }
  func.func @transform_0(%arg0: i32, %arg1: i32) -> (i32, i32, i32, i32) {
    %c0_i32 = arith.constant 0 : i32
    %c0_i32_0 = arith.constant 0 : i32
    %c0_i32_1 = arith.constant 0 : i32
    return %c0_i32, %arg0, %arg1, %c0_i32_0 : i32, i32, i32, i32
  }
  func.func @transform_1(%arg0: i32, %arg1: i32) -> (i32, i32) {
    %c0_i32 = arith.constant 0 : i32
    %c0_i32_0 = arith.constant 0 : i32
    return %arg1, %c0_i32 : i32, i32
  }
  func.func @transform_2(%arg0: i32, %arg1: i32) -> (i32, i32) {
    %c0_i32 = arith.constant 0 : i32
    %c0_i32_0 = arith.constant 0 : i32
    %c0_i32_1 = arith.constant 0 : i32
    return %c0_i32, %c0_i32_0 : i32, i32
  }
  func.func @transform_3(%arg0: i32, %arg1: i32) -> i32 {
    %c0_i32 = arith.constant 0 : i32
    %c0_i32_0 = arith.constant 0 : i32
    return %c0_i32 : i32
  }
  func.func @transform_4(%arg0: i32, %arg1: i32) -> (i32, i32, i32) {
    %c0_i32 = arith.constant 0 : i32
    %c0_i32_0 = arith.constant 0 : i32
    return %arg0, %arg1, %c0_i32 : i32, i32, i32
  }
}

</mosaic_0001>

<llo_original>
// kernel: cmaxga2_forward.1
$region0: #{cmaxga2_forward.1}
  #allocation0 [shape = 'u32[]', space=smem, size = 0x4, offset = 0x4, fixed_abs, tag = 'smem constant byte address 0x4 - core index']
  #allocation1 [shape = 'u32[72,128]{1,0:T(1,128)}', space=vmem, size = 0x9000, scoped, tag = 'internal scratch']
  %s0 = inlined_call_operand.vmem [shape: f32[4,2,8,64], index: 0, kind: input, shape index: {}]
  %s1 = inlined_call_operand.vmem [shape: f32[8,24], index: 1, kind: input, shape index: {}]
  %s2 = inlined_call_operand.vmem [shape: f32[3,64], index: 2, kind: input, shape index: {}]
  %s3 = inlined_call_operand.vmem [shape: f32[16], index: 3, kind: input, shape index: {}]
  %s4 = inlined_call_operand.vmem [shape: f32[2,8,64], index: 4, kind: output, shape index: {}]
  %s5 = sld [smem:[#allocation0]]
  $region91: #{cmaxga2_forward.1} parent=0
    _
  %s7 = ssub.s32 1, %s5
  %s8 = scalar_select 0, %s7, %s5
  $region1: #{cmaxga2_forward.1} parent=0
    #allocation2 [shape = 'u8[32768]{0}', space=vmem, size = 0x8000, scoped, tag = 'input window, operand 0']
    #allocation3 [shape = 'u8[512]{0}', space=smem, size = 0x200, scoped, tag = 'input window, operand 3, single buffered']
    #allocation4 [shape = 's32[2]{0}', space=sflag, size = 0x8, scoped, tag = 'scoped memory for cmaxga2_forward.1']
    %9 = vsyncpa [#allocation4], 0
    loop: start=0, step=1, limit=4
    $region2: #{cmaxga2_forward.1} parent=1 // loop_pre_header
      _
    $region3: #{cmaxga2_forward.1} parent=1 // loop_header
      %s11 = sphi 0, %s15
      %p12 = scmp.ge.s32.totalorder %s11, 4
      %s18 = sphi 0, %s30
      %s19 = sphi 0, %s26
      %s20 = sphi 0, %s18
      %s21 = sphi 0, %s19
      %s22 = sphi 0, %s20
      %s23 = sphi 0, %s21
      %s35 = sphi 0, %s37
      %s38 = sphi 0, %s35
      %s39 = sphi 0, %s38
      %s55 = sphi 0, %s39
      %s61 = sphi 0, %s63
      %s64 = sphi 0, %s61
      %s65 = sphi 0, %s64
      %s81 = sphi 0, %s65
      %s85 = sphi 0, %s85
      %s87 = sphi 0, %s85
      %s88 = sphi 0, %s87
      %s102 = sphi 0, %s88
      %s106 = sphi 0, %s106
      %s108 = sphi 0, %s106
      %s109 = sphi 0, %s108
      %s123 = sphi 0, %s109
      %s131 = sphi 0, %s133
      %s134 = sphi 0, %s131
      %s135 = sphi 0, %s134
      %s151 = sphi 0, %s135
    $region4: #{cmaxga2_forward.1} parent=1 // loop_header_branch
      %14 = sbr.rel (%p12) target = $region8
    $region5: #{cmaxga2_forward.1} parent=1 // loop_body
      %s16 = ssub.s32 %s11, 1
      %s17 = ssub.s32 %s11, 2
      %s24 = sadd.s32 1, %s19
      %p25 = scmp.ge.s32.totalorder %s24, 1
      %s26 = scalar_select %p25, 0, %s24
      %s27 = sadd.s32 1, %s18
      %s28 = scalar_select %p25, %s27, %s18
      %p29 = scmp.ge.s32.totalorder %s28, 2
      %s30 = scalar_select %p29, 0, %s28
      %s31 = ssub.s32 %s18, %s30
      %s32 = ssub.s32 %s19, %s26
      %s33 = sor.u32 %s31, %s32
      %p34 = scmp.eq.s32.totalorder %s33, 0
      %s36 = sadd.s32 %s35, 1
      %s37 = scalar_select %p34, %s35, %s36
      %p40 = pneg %p34
      %p41 = scmp.eq.s32.totalorder %s11, 1
      %p42 = por %p40, %p41
      %p43 = scmp.ne.s32.totalorder %s35, %s38
      %p44 = scmp.eq.s32.totalorder %s11, 0
      %p45 = por %p43, %p44
      %p46 = scmp.ne.s32.totalorder %s35, %s38
      %p47 = scmp.eq.s32.totalorder %s16, 1
      %p48 = por %p46, %p47
      %p49 = scmp.ne.s32.totalorder %s38, %s39
      %p50 = scmp.eq.s32.totalorder %s16, 0
      %p51 = por %p49, %p50
      %p52 = scmp.ne.s32.totalorder %s38, %s39
      %p53 = scmp.eq.s32.totalorder %s17, 1
      %p54 = por %p52, %p53
      %p56 = scmp.ne.s32.totalorder %s39, %s55
      %p57 = scmp.eq.s32.totalorder %s17, 0
      %p58 = por %p56, %p57
      %s59 = ssub.s32 %s19, %s26
      %p60 = scmp.eq.s32.totalorder %s59, 0
      %s62 = sadd.s32 %s61, 1
      %s63 = scalar_select %p60, %s61, %s62
      %p66 = pneg %p60
      %p67 = scmp.eq.s32.totalorder %s11, 1
      %p68 = por %p66, %p67
      %p69 = scmp.ne.s32.totalorder %s61, %s64
      %p70 = scmp.eq.s32.totalorder %s11, 0
      %p71 = por %p69, %p70
      %p72 = scmp.ne.s32.totalorder %s61, %s64
      %p73 = scmp.eq.s32.totalorder %s16, 1
      %p74 = por %p72, %p73
      %p75 = scmp.ne.s32.totalorder %s64, %s65
      %p76 = scmp.eq.s32.totalorder %s16, 0
      %p77 = por %p75, %p76
      %p78 = scmp.ne.s32.totalorder %s64, %s65
      %p79 = scmp.eq.s32.totalorder %s17, 1
      %p80 = por %p78, %p79
      %p82 = scmp.ne.s32.totalorder %s65, %s81
      %p83 = scmp.eq.s32.totalorder %s17, 0
      %p84 = por %p82, %p83
      %s86 = sadd.s32 %s85, 1
      %p89 = scmp.eq.s32.totalorder %s11, 1
      %p90 = scmp.ne.s32.totalorder %s85, %s87
      %p91 = scmp.eq.s32.totalorder %s11, 0
      %p92 = por %p90, %p91
      %p93 = scmp.ne.s32.totalorder %s85, %s87
      %p94 = scmp.eq.s32.totalorder %s16, 1
      %p95 = por %p93, %p94
      %p96 = scmp.ne.s32.totalorder %s87, %s88
      %p97 = scmp.eq.s32.totalorder %s16, 0
      %p98 = por %p96, %p97
      %p99 = scmp.ne.s32.totalorder %s87, %s88
      %p100 = scmp.eq.s32.totalorder %s17, 1
      %p101 = por %p99, %p100
      %p103 = scmp.ne.s32.totalorder %s88, %s102
      %p104 = scmp.eq.s32.totalorder %s17, 0
      %p105 = por %p103, %p104
      %s107 = sadd.s32 %s106, 1
      %p110 = scmp.eq.s32.totalorder %s11, 1
      %p111 = scmp.ne.s32.totalorder %s106, %s108
      %p112 = scmp.eq.s32.totalorder %s11, 0
      %p113 = por %p111, %p112
      %p114 = scmp.ne.s32.totalorder %s106, %s108
      %p115 = scmp.eq.s32.totalorder %s16, 1
      %p116 = por %p114, %p115
      %p117 = scmp.ne.s32.totalorder %s108, %s109
      %p118 = scmp.eq.s32.totalorder %s16, 0
      %p119 = por %p117, %p118
      %p120 = scmp.ne.s32.totalorder %s108, %s109
      %p121 = scmp.eq.s32.totalorder %s17, 1
      %p122 = por %p120, %p121
      %p124 = scmp.ne.s32.totalorder %s109, %s123
      %p125 = scmp.eq.s32.totalorder %s17, 0
      %p126 = por %p124, %p125
      %s127 = ssub.s32 %s18, %s30
      %s128 = ssub.s32 %s19, %s26
      %s129 = sor.u32 %s127, %s128
      %p130 = scmp.eq.s32.totalorder %s129, 0
      %s132 = sadd.s32 %s131, 1
      %s133 = scalar_select %p130, %s131, %s132
      %p136 = pneg %p130
      %p137 = scmp.eq.s32.totalorder %s11, 1
      %p138 = por %p136, %p137
      %p139 = scmp.ne.s32.totalorder %s131, %s134
      %p140 = scmp.eq.s32.totalorder %s11, 0
      %p141 = por %p139, %p140
      %p142 = scmp.ne.s32.totalorder %s131, %s134
      %p143 = scmp.eq.s32.totalorder %s16, 1
      %p144 = por %p142, %p143
      %p145 = scmp.ne.s32.totalorder %s134, %s135
      %p146 = scmp.eq.s32.totalorder %s16, 0
      %p147 = por %p145, %p146
      %p148 = scmp.ne.s32.totalorder %s134, %s135
      %p149 = scmp.eq.s32.totalorder %s17, 1
      %p150 = por %p148, %p149
      %p152 = scmp.ne.s32.totalorder %s135, %s151
      %p153 = scmp.eq.s32.totalorder %s17, 0
      %p154 = por %p152, %p153
      %p155 = scmp.le.s32.totalorder 1, %s11
      %p156 = scmp.lt.s32.totalorder %s11, 3
      %p157 = pnand %p155, %p156
      %p158 = pneg %p157
      // Predicated region
      $region9: #{cmaxga2_forward.1} parent=5 // pred_check
        _
      $region10: #{cmaxga2_forward.1} parent=5 // pred_check_branch
        %160 = sbr.rel (%p157) target = $region12
      $region11: #{cmaxga2_forward.1} parent=5 // pred_region
        %s161 = ssub.s32 %s11, 1
        // Predicated region
        $region13: #{cmaxga2_forward.1} parent=11 // pred_check
          %p162 = pneg %p77
        $region14: #{cmaxga2_forward.1} parent=11 // pred_check_branch
          %164 = sbr.rel (%p162) target = $region16
        $region15: #{cmaxga2_forward.1} parent=11 // pred_region
          %p165 = scmp.lt.s32.totalorder %s21, 0
          %s166 = scalar_select %p165, %s21, 0
          %s167 = smul.addr %s166, 8
          %s168 = scalar_lea.vmem %s1, %s167
        $region16: #{cmaxga2_forward.1} parent=11 // pred_fallthru
          _
        // Predicated region
        $region17: #{cmaxga2_forward.1} parent=11 // pred_check
          %p169 = pneg %p98
        $region18: #{cmaxga2_forward.1} parent=11 // pred_check_branch
          %171 = sbr.rel (%p169) target = $region20
        $region19: #{cmaxga2_forward.1} parent=11 // pred_region
          _
        $region20: #{cmaxga2_forward.1} parent=11 // pred_fallthru
          _
        // Predicated region
        $region21: #{cmaxga2_forward.1} parent=11 // pred_check
          %p172 = pneg %p119
        $region22: #{cmaxga2_forward.1} parent=11 // pred_check_branch
          %174 = sbr.rel (%p172) target = $region24
        $region23: #{cmaxga2_forward.1} parent=11 // pred_region
          %176 = vsyncadd [#allocation4], 0
          %s178 = sshll.u32 %s3, 4
          %s179 = int_to_ptr.vmem [resolvable:$true] %s178
          %181 = dma.vmem_to_smem %s179, 16, [#allocation3], [#allocation4]
        $region24: #{cmaxga2_forward.1} parent=11 // pred_fallthru
          _
      $region12: #{cmaxga2_forward.1} parent=5 // pred_fallthru
        _
      %p182 = scmp.lt.s32.totalorder %s11, 2
      // Predicated region
      $region25: #{cmaxga2_forward.1} parent=5 // pred_check
        %p183 = pneg %p182
      $region26: #{cmaxga2_forward.1} parent=5 // pred_check_branch
        %185 = sbr.rel (%p183) target = $region28
      $region27: #{cmaxga2_forward.1} parent=5 // pred_region
        // Predicated region
        $region29: #{cmaxga2_forward.1} parent=27 // pred_check
          %p186 = pneg %p45
        $region30: #{cmaxga2_forward.1} parent=27 // pred_check_branch
          %188 = sbr.rel (%p186) target = $region32
        $region31: #{cmaxga2_forward.1} parent=27 // pred_region
          %s189 = sand.u32 %s35, 1
          %s190 = sand.u32 %s35, 1
          %s191 = smul.addr %s190, 32
          %s192 = scalar_lea.vmem [#allocation2], %s191
          %s193 = sadd.s32 %s19, %s18
          %s194 = smul.addr %s193, 8
          %s195 = scalar_lea.vmem %s0, %s194
          // Predicated region
          $region33: #{cmaxga2_forward.1} parent=31 // pred_check
            _
          $region34: #{cmaxga2_forward.1} parent=31 // pred_check_branch
            %197 = sbr.rel (0) target = $region36
          $region35: #{cmaxga2_forward.1} parent=31 // pred_region
            // Predicated region
            $region37: #{cmaxga2_forward.1} parent=35 // pred_check
              _
            $region38: #{cmaxga2_forward.1} parent=35 // pred_check_branch
              %199 = sbr.rel (0) target = $region40
            $region39: #{cmaxga2_forward.1} parent=35 // pred_region
              // Predicated region
              $region52: #{cmaxga2_forward.1} parent=39 // pred_check
                _
              $region53: #{cmaxga2_forward.1} parent=39 // pred_check_branch
                %221 = sbr.rel (0) target = $region55
              $region54: #{cmaxga2_forward.1} parent=39 // pred_region
                loop: start=0, step=1, limit=1
                $region56: #{cmaxga2_forward.1} parent=54 // loop_pre_header
                  _
                $region57: #{cmaxga2_forward.1} parent=54 // loop_header
                  %s223 = sphi 0, %s227
                  %p224 = scmp.ge.s32.totalorder %s223, 1
                  %s228 = sphi %s195, %s195
                  %s229 = sphi %s192, %s192
                $region58: #{cmaxga2_forward.1} parent=54 // loop_header_branch
                  %226 = sbr.rel (%p224) target = $region62
                $region59: #{cmaxga2_forward.1} parent=54 // loop_body
                  %v230 = vld [vmem:[%s228] sm:$0xff]
                  %231 = vst [vmem:[%s229] sm:$0xff] %v230
                  %v232 = vld [vmem:[%s228 + $0x10] sm:$0xff]
                  %233 = vst [vmem:[%s229 + $0x8] sm:$0xff] %v232
                  %v234 = vld [vmem:[%s228 + $0x20] sm:$0xff]
                  %235 = vst [vmem:[%s229 + $0x10] sm:$0xff] %v234
                  %v236 = vld [vmem:[%s228 + $0x30] sm:$0xff]
                  %237 = vst [vmem:[%s229 + $0x18] sm:$0xff] %v236
                $region60: #{cmaxga2_forward.1} parent=54 // loop_footer
                  %s227 = sadd.s32 1, %s223
                $region61: #{cmaxga2_forward.1} parent=54 // loop_footer_branch
                  %222 = sbr.rel target = $region57
                $region62: #{cmaxga2_forward.1} parent=54 // loop_exit
                  _
              $region55: #{cmaxga2_forward.1} parent=39 // pred_fallthru
                _
              // Predicated region
              $region63: #{cmaxga2_forward.1} parent=39 // pred_check
                _
              $region64: #{cmaxga2_forward.1} parent=39 // pred_check_branch
                %239 = sbr.rel target = $region66
              $region65: #{cmaxga2_forward.1} parent=39 // pred_region
                _
              $region66: #{cmaxga2_forward.1} parent=39 // pred_fallthru
                _
            $region40: #{cmaxga2_forward.1} parent=35 // pred_fallthru
              _
            // Predicated region
            $region41: #{cmaxga2_forward.1} parent=35 // pred_check
              _
            $region42: #{cmaxga2_forward.1} parent=35 // pred_check_branch
              %201 = sbr.rel target = $region44
            $region43: #{cmaxga2_forward.1} parent=35 // pred_region
              %s203 = ssub.s32 256, 1
              loop: start=0, step=1, limit=1
              $region45: #{cmaxga2_forward.1} parent=43 // loop_pre_header
                _
              $region46: #{cmaxga2_forward.1} parent=43 // loop_header
                %s205 = sphi 0, %s209
                %p206 = scmp.ge.s32.totalorder %s205, 1
                %s210 = sphi %s195, %s195
                %s211 = sphi %s192, %s192
              $region47: #{cmaxga2_forward.1} parent=43 // loop_header_branch
                %208 = sbr.rel (%p206) target = $region51
              $region48: #{cmaxga2_forward.1} parent=43 // loop_body
                %v212 = vld [vmem:[%s210] sm:%s203]
                %213 = vst [vmem:[%s211] sm:%s203] %v212
                %v214 = vld [vmem:[%s210 + $0x10] sm:%s203]
                %215 = vst [vmem:[%s211 + $0x8] sm:%s203] %v214
                %v216 = vld [vmem:[%s210 + $0x20] sm:%s203]
                %217 = vst [vmem:[%s211 + $0x10] sm:%s203] %v216
                %v218 = vld [vmem:[%s210 + $0x30] sm:%s203]
                %219 = vst [vmem:[%s211 + $0x18] sm:%s203] %v218
              $region49: #{cmaxga2_forward.1} parent=43 // loop_footer
                %s209 = sadd.s32 1, %s205
              $region50: #{cmaxga2_forward.1} parent=43 // loop_footer_branch
                %204 = sbr.rel target = $region46
              $region51: #{cmaxga2_forward.1} parent=43 // loop_exit
                _
            $region44: #{cmaxga2_forward.1} parent=35 // pred_fallthru
              _
          $region36: #{cmaxga2_forward.1} parent=31 // pred_fallthru
            _
          %240 = vnop
        $region32: #{cmaxga2_forward.1} parent=27 // pred_fallthru
          _
      $region28: #{cmaxga2_forward.1} parent=5 // pred_fallthru
        _
      %p241 = scmp.le.s32.totalorder 1, %s11
      %p242 = scmp.lt.s32.totalorder %s11, 3
      %p243 = pnand %p241, %p242
      %p244 = pneg %p243
      // Predicated region
      $region67: #{cmaxga2_forward.1} parent=5 // pred_check
        _
      $region68: #{cmaxga2_forward.1} parent=5 // pred_check_branch
        %246 = sbr.rel (%p243) target = $region70
      $region69: #{cmaxga2_forward.1} parent=5 // pred_region
        %s247 = ssub.s32 %s11, 1
        %s248 = sand.u32 %s38, 1
        %s249 = sand.u32 %s38, 1
        %s250 = smul.addr %s249, 32
        %s251 = scalar_lea.vmem [#allocation2], %s250
        // Predicated region
        $region71: #{cmaxga2_forward.1} parent=69 // pred_check
          %p252 = pneg %p51
        $region72: #{cmaxga2_forward.1} parent=69 // pred_check_branch
          %254 = sbr.rel (%p252) target = $region74
        $region73: #{cmaxga2_forward.1} parent=69 // pred_region
          _
        $region74: #{cmaxga2_forward.1} parent=69 // pred_fallthru
          _
        // Predicated region
        $region75: #{cmaxga2_forward.1} parent=69 // pred_check
          %p255 = pneg %p119
        $region76: #{cmaxga2_forward.1} parent=69 // pred_check_branch
          %257 = sbr.rel (%p255) target = $region78
        $region77: #{cmaxga2_forward.1} parent=69 // pred_region
          %259 = dma.done [#allocation4], 16
        $region78: #{cmaxga2_forward.1} parent=69 // pred_fallthru
          _
        %260 = sfence
        %s261 = sand.u32 %s38, 1
        %s262 = sand.u32 %s38, 1
        %s263 = smul.addr %s262, 32
        %s264 = scalar_lea.vmem [#allocation2], %s263
        %p265 = pneg %p51
        %p266 = pneg %p48
        %p267 = scmp.lt.s32.totalorder %s21, 0
        %s268 = scalar_select %p267, %s21, 0
        %s269 = smul.addr %s268, 8
        %s270 = scalar_lea.vmem %s1, %s269
        %p271 = pneg %p77
        %p272 = pneg %p74
        %p273 = pneg %p98
        %p274 = pneg %p95
        %p275 = pneg %p119
        %p276 = pneg %p116
        %p277 = pneg %p147
        %p278 = pneg %p144
        %p279 = scmp.lt.s32.totalorder %s20, 1
        %s280 = scalar_select %p279, %s20, 1
        %p281 = scmp.lt.s32.totalorder %s21, 0
        %s282 = scalar_select %p281, %s21, 0
        %s283 = sadd.s32 %s282, %s280
        %s284 = smul.addr %s283, 8
        %s285 = scalar_lea.vmem %s4, %s284
        %p286 = scmp.lt.s32.totalorder %s21, 0
        %s287 = scalar_select %p286, %s21, 0
        %s288 = smul.addr %s287, 8
        %s289 = scalar_lea.vmem %s1, %s288
        %p290 = scmp.lt.s32.totalorder %s20, 1
        %s291 = scalar_select %p290, %s20, 1
        %p292 = scmp.lt.s32.totalorder %s21, 0
        %s293 = scalar_select %p292, %s21, 0
        %s294 = sadd.s32 %s293, %s291
        %s295 = smul.addr %s294, 8
        %s296 = scalar_lea.vmem %s4, %s295
        %v297 = vld [vmem:[%s251] sm:$0xff]
        %s298 = scalar_lea.vmem %s251, 8 [#allocation2]
        %v299 = vld [vmem:[%s298] sm:$0xff]
        %s300 = scalar_lea.vmem %s251, 16 [#allocation2]
        %v301 = vld [vmem:[%s300] sm:$0xff]
        %s302 = scalar_lea.vmem %s251, 24 [#allocation2]
        %v303 = vld [vmem:[%s302] sm:$0xff]
        %v304 = vmax.f32 %v297, %v299
        %v305 = vmax.f32 %v301, %v303
        %v306 = vmax.f32 %v304, %v305
        %v307 = vld [vmem:[%s289] sm:$0xff]
        %309 = vset.pattern.permute.xlu0 0
        %310 = vperm.xlu0 %309, %v307
        %v311 = vpop.permute.xlu0 %310
        %v313 = vmul.f32 %v297, %v311
        %314 = vset.pattern.permute.xlu0 1
        %315 = vperm.xlu0 %314, %v307
        %v316 = vpop.permute.xlu0 %315
        %v318 = vmul.f32 %v299, %v316
        %v319 = vadd.f32 %v313, %v318
        %320 = vset.pattern.permute.xlu0 2
        %321 = vperm.xlu0 %320, %v307
        %v322 = vpop.permute.xlu0 %321
        %v324 = vmul.f32 %v301, %v322
        %v325 = vadd.f32 %v319, %v324
        %326 = vset.pattern.permute.xlu0 3
        %327 = vperm.xlu0 %326, %v307
        %v328 = vpop.permute.xlu0 %327
        %v330 = vmul.f32 %v303, %v328
        %v331 = vadd.f32 %v325, %v330
        %332 = vset.pattern.permute.xlu0 4
        %333 = vperm.xlu0 %332, %v307
        %v334 = vpop.permute.xlu0 %333
        %v336 = vadd.f32 %v331, %v334
        %v337 = vmul.f32 %v306, %v336
        %338 = vset.pattern.permute.xlu0 5
        %339 = vperm.xlu0 %338, %v307
        %v340 = vpop.permute.xlu0 %339
        %v342 = vmul.f32 %v297, %v340
        %343 = vset.pattern.permute.xlu0 6
        %344 = vperm.xlu0 %343, %v307
        %v345 = vpop.permute.xlu0 %344
        %v347 = vmul.f32 %v299, %v345
        %v348 = vadd.f32 %v342, %v347
        %349 = vset.pattern.permute.xlu0 7
        %350 = vperm.xlu0 %349, %v307
        %v351 = vpop.permute.xlu0 %350
        %v353 = vmul.f32 %v301, %v351
        %v354 = vadd.f32 %v348, %v353
        %355 = vset.pattern.permute.xlu0 8
        %356 = vperm.xlu0 %355, %v307
        %v357 = vpop.permute.xlu0 %356
        %v359 = vmul.f32 %v303, %v357
        %v360 = vadd.f32 %v354, %v359
        %361 = vset.pattern.permute.xlu0 17
        %362 = vperm.xlu0 %361, %v307
        %v363 = vpop.permute.xlu0 %362
        %v365 = vadd.f32 %v360, %v363
        %v366 = vtanh.pop %v365
        %s367 = sld [smem:[#allocation3]]
        %v368 = vstv %s367
        %v369 = vmul.f32 %v297, %v368
        %s370 = sld [smem:[#allocation3 + $0x1]]
        %v371 = vstv %s370
        %v372 = vmul.f32 %v299, %v371
        %v373 = vadd.f32 %v369, %v372
        %s374 = sld [smem:[#allocation3 + $0x2]]
        %v375 = vstv %s374
        %v376 = vmul.f32 %v301, %v375
        %v377 = vadd.f32 %v373, %v376
        %s378 = sld [smem:[#allocation3 + $0x3]]
        %v379 = vstv %s378
        %v380 = vmul.f32 %v303, %v379
        %v381 = vadd.f32 %v377, %v380
        %382 = vset.pattern.permute.xlu0 20
        %383 = vperm.xlu0 %382, %v307
        %v384 = vpop.permute.xlu0 %383
        %v386 = vadd.f32 %v381, %v384
        %s387 = sld [smem:[#allocation3 + $0x4]]
        %v388 = vstv %s387
        %v389 = vmul.f32 %v297, %v388
        %s390 = sld [smem:[#allocation3 + $0x5]]
        %v391 = vstv %s390
        %v392 = vmul.f32 %v299, %v391
        %v393 = vadd.f32 %v389, %v392
        %s394 = sld [smem:[#allocation3 + $0x6]]
        %v395 = vstv %s394
        %v396 = vmul.f32 %v301, %v395
        %v397 = vadd.f32 %v393, %v396
        %s398 = sld [smem:[#allocation3 + $0x7]]
        %v399 = vstv %s398
        %v400 = vmul.f32 %v303, %v399
        %v401 = vadd.f32 %v397, %v400
        %402 = vset.pattern.permute.xlu0 21
        %403 = vperm.xlu0 %402, %v307
        %v404 = vpop.permute.xlu0 %403
        %v406 = vadd.f32 %v401, %v404
        %v407 = vmul.f32 %v366, %v406
        %v408 = vadd.f32 %v386, %v407
        %409 = vset.pattern.permute.xlu0 9
        %410 = vperm.xlu0 %409, %v307
        %v411 = vpop.permute.xlu0 %410
        %v413 = vmul.f32 %v297, %v411
        %414 = vset.pattern.permute.xlu0 10
        %415 = vperm.xlu0 %414, %v307
        %v416 = vpop.permute.xlu0 %415
        %v418 = vmul.f32 %v299, %v416
        %v419 = vadd.f32 %v413, %v418
        %420 = vset.pattern.permute.xlu0 11
        %421 = vperm.xlu0 %420, %v307
        %v422 = vpop.permute.xlu0 %421
        %v424 = vmul.f32 %v301, %v422
        %v425 = vadd.f32 %v419, %v424
        %426 = vset.pattern.permute.xlu0 12
        %427 = vperm.xlu0 %426, %v307
        %v428 = vpop.permute.xlu0 %427
        %v430 = vmul.f32 %v303, %v428
        %v431 = vadd.f32 %v425, %v430
        %432 = vset.pattern.permute.xlu0 18
        %433 = vperm.xlu0 %432, %v307
        %v434 = vpop.permute.xlu0 %433
        %v436 = vadd.f32 %v431, %v434
        %v437 = vtanh.pop %v436
        %s438 = sld [smem:[#allocation3 + $0x8]]
        %v439 = vstv %s438
        %v440 = vmul.f32 %v297, %v439
        %s441 = sld [smem:[#allocation3 + $0x9]]
        %v442 = vstv %s441
        %v443 = vmul.f32 %v299, %v442
        %v444 = vadd.f32 %v440, %v443
        %s445 = sld [smem:[#allocation3 + $0xa]]
        %v446 = vstv %s445
        %v447 = vmul.f32 %v301, %v446
        %v448 = vadd.f32 %v444, %v447
        %s449 = sld [smem:[#allocation3 + $0xb]]
        %v450 = vstv %s449
        %v451 = vmul.f32 %v303, %v450
        %v452 = vadd.f32 %v448, %v451
        %453 = vset.pattern.permute.xlu0 22
        %454 = vperm.xlu0 %453, %v307
        %v455 = vpop.permute.xlu0 %454
        %v457 = vadd.f32 %v452, %v455
        %s458 = sld [smem:[#allocation3 + $0xc]]
        %v459 = vstv %s458
        %v460 = vmul.f32 %v297, %v459
        %s461 = sld [smem:[#allocation3 + $0xd]]
        %v462 = vstv %s461
        %v463 = vmul.f32 %v299, %v462
        %v464 = vadd.f32 %v460, %v463
        %s465 = sld [smem:[#allocation3 + $0xe]]
        %v466 = vstv %s465
        %v467 = vmul.f32 %v301, %v466
        %v468 = vadd.f32 %v464, %v467
        %s469 = sld [smem:[#allocation3 + $0xf]]
        %v470 = vstv %s469
        %v471 = vmul.f32 %v303, %v470
        %v472 = vadd.f32 %v468, %v471
        %473 = vset.pattern.permute.xlu0 23
        %474 = vperm.xlu0 %473, %v307
        %v475 = vpop.permute.xlu0 %474
        %v477 = vadd.f32 %v472, %v475
        %v478 = vmul.f32 %v437, %v477
        %v479 = vadd.f32 %v457, %v478
        %v480 = vld [vmem:[%s2] sm:$0x1]
        %v481 = vld [vmem:[%s2 + $0x1] sm:$0x1]
        %v482 = vld [vmem:[%s2 + $0x2] sm:$0x1]
        %483 = vset.pattern.permute.xlu0 13
        %484 = vperm.xlu0 %483, %v307
        %v485 = vpop.permute.xlu0 %484
        %v487 = vmul.f32 %v408, %v485
        %vm488 = vcmask 1048064
        %489 = vrot.lane.b32.xlu0 %v408, 64
        %v490 = vpop.permute.xlu0 %489
        %v491 = vsel %vm488, %v490, %v408
        %492 = vrot.lane.b32.xlu0 %v491, 64
        %v493 = vpop.permute.xlu0 %492
        %v494 = vsel %vm488, %v493, %v408
        %v495 = vperm.slane %v480, 0
        %497 = vrot.lane.b32.xlu0 %v495, 1
        %v498 = vpop.permute.xlu0 %497
        %v500 = vmul.f32 %v494, %v498
        %501 = vset.pattern.permute.xlu0 14
        %502 = vperm.xlu0 %501, %v307
        %v503 = vpop.permute.xlu0 %502
        %v505 = vmul.f32 %v500, %v503
        %507 = vrot.lane.b32.xlu0 %v505, 127
        %v508 = vpop.permute.xlu0 %507
        %v510 = vadd.f32 %v487, %v508
        %v511 = vperm.slane %v481, 0
        %513 = vrot.lane.b32.xlu0 %v511, 8
        %v514 = vpop.permute.xlu0 %513
        %v516 = vmul.f32 %v494, %v514
        %517 = vset.pattern.permute.xlu0 15
        %518 = vperm.xlu0 %517, %v307
        %v519 = vpop.permute.xlu0 %518
        %v521 = vmul.f32 %v516, %v519
        %523 = vrot.lane.b32.xlu0 %v521, 120
        %v524 = vpop.permute.xlu0 %523
        %v526 = vadd.f32 %v510, %v524
        %v527 = vperm.slane %v482, 0
        %529 = vrot.lane.b32.xlu0 %v527, 9
        %v530 = vpop.permute.xlu0 %529
        %v532 = vmul.f32 %v494, %v530
        %533 = vset.pattern.permute.xlu0 16
        %534 = vperm.xlu0 %533, %v307
        %v535 = vpop.permute.xlu0 %534
        %v537 = vmul.f32 %v532, %v535
        %539 = vrot.lane.b32.xlu0 %v537, 119
        %v540 = vpop.permute.xlu0 %539
        %v542 = vadd.f32 %v526, %v540
        %543 = vset.pattern.permute.xlu0 19
        %544 = vperm.xlu0 %543, %v307
        %v545 = vpop.permute.xlu0 %544
        %v547 = vadd.f32 %v542, %v545
        %v548 = vtanh.pop %v547
        %v549 = vsub.f32 %v408, %v479
        %v550 = vmul.f32 %v549, 0.5
        %v551 = vadd.f32 %v479, %v550
        %v552 = vadd.f32 %v337, %v551
        %v553 = vmul.f32 %v548, %v550
        %v554 = vadd.f32 %v552, %v553
        %vm555 = vcmask 523264
        %556 = vst.msk [vmem:[%s296] sm:$0xff] %vm555, %v554
        %p557 = scmp.lt.s32.totalorder %s20, 1
        %s558 = scalar_select %p557, %s20, 1
        %p559 = scmp.lt.s32.totalorder %s21, 0
        %s560 = scalar_select %p559, %s21, 0
        %s561 = sadd.s32 %s560, %s558
        %s562 = smul.addr %s561, 8
        %s563 = scalar_lea.vmem %s4, %s562
        // Predicated region
        $region79: #{cmaxga2_forward.1} parent=69 // pred_check
          %p564 = pneg %p144
        $region80: #{cmaxga2_forward.1} parent=69 // pred_check_branch
          %566 = sbr.rel (%p564) target = $region82
        $region81: #{cmaxga2_forward.1} parent=69 // pred_region
          _
        $region82: #{cmaxga2_forward.1} parent=69 // pred_fallthru
          _
      $region70: #{cmaxga2_forward.1} parent=5 // pred_fallthru
        _
      %p567 = scmp.le.s32.totalorder 2, %s11
      // Predicated region
      $region83: #{cmaxga2_forward.1} parent=5 // pred_check
        %p568 = pneg %p567
      $region84: #{cmaxga2_forward.1} parent=5 // pred_check_branch
        %570 = sbr.rel (%p568) target = $region86
      $region85: #{cmaxga2_forward.1} parent=5 // pred_region
        %s571 = ssub.s32 %s11, 2
        // Predicated region
        $region87: #{cmaxga2_forward.1} parent=85 // pred_check
          %p572 = pneg %p150
        $region88: #{cmaxga2_forward.1} parent=85 // pred_check_branch
          %574 = sbr.rel (%p572) target = $region90
        $region89: #{cmaxga2_forward.1} parent=85 // pred_region
          %p575 = scmp.lt.s32.totalorder %s22, 1
          %s576 = scalar_select %p575, %s22, 1
          %p577 = scmp.lt.s32.totalorder %s23, 0
          %s578 = scalar_select %p577, %s23, 0
          %s579 = sadd.s32 %s578, %s576
          %s580 = smul.addr %s579, 8
          %s581 = scalar_lea.vmem %s4, %s580
        $region90: #{cmaxga2_forward.1} parent=85 // pred_fallthru
          _
      $region86: #{cmaxga2_forward.1} parent=5 // pred_fallthru
        _
    $region6: #{cmaxga2_forward.1} parent=1 // loop_footer
      %s15 = sadd.s32 1, %s11
    $region7: #{cmaxga2_forward.1} parent=1 // loop_footer_branch
      %10 = sbr.rel target = $region3
    $region8: #{cmaxga2_forward.1} parent=1 // loop_exit
      _
    %582 = vsyncpa [#allocation4], 1
    %s583 = scalar_lea.sflag [#allocation4], 1
    %584 = vsyncpa %s583, 1

</llo_original>
